<compile_context>
chip_gen: v6e
topology: v6e:2x2x1
jax: 0.10.0
libtpu: 0.0.40
codegen_flags: <defaults>
</compile_context>

<pallas_src>
import jax
import jax.numpy as jnp
from jax.experimental import pallas as pl
from jax.experimental.pallas import tpu as pltpu

LANE = 128
EPS = 1e-5


def _make_fused_kernel(block_cfg, eps: float = EPS):
    """block_cfg: tuple of (use_bn, use_elu) per layer (static Python)."""

    def kernel(x_ref, w_ref, b_ref, g_ref, beta_ref, o_ref):
        h = x_ref[...]  # (B, 128) f32, padded lanes are zero
        for li, (use_bn, use_elu) in enumerate(block_cfg):
            # Linear on the MXU: y = h @ W  (bias handled below)
            y = jnp.dot(h, w_ref[li], preferred_element_type=jnp.float32)
            if use_bn:
                # Bias cancels under mean subtraction -> skipped (dead compute).
                # BatchNorm1d, training mode: batch mean, biased variance, eps=1e-5.
                mean = jnp.mean(y, axis=0, keepdims=True)
                cen = y - mean
                var = jnp.mean(cen * cen, axis=0, keepdims=True)
                y = cen * jax.lax.rsqrt(var + eps)
                y = y * g_ref[li] + beta_ref[li]
            else:
                y = y + b_ref[li]
            if use_elu:
                # ELU(alpha=1): x if x > 0 else exp(x) - 1 (EUP exp, overflow-safe)
                y = jnp.where(y > 0.0, y, jnp.exp(jnp.minimum(y, 0.0)) - 1.0)
            h = y
        o_ref[...] = h  # lane-dense (B, 128) store

    return kernel


def init_params(key, N, latent, layers):
    """Deterministic init mimicking PyTorch defaults (unpadded, for the reference).

    Linear: W, b ~ U(-1/sqrt(in_dim), 1/sqrt(in_dim)); BN: gamma=1, beta=0.
    Weights are stored transposed vs. PyTorch, i.e. (in_dim, out_dim).
    """
    dims = []
    in_dim = N
    for out_dim in layers:                 # encoder
        dims.append((in_dim, out_dim, True, True))    # BN + ELU
        in_dim = out_dim
    dims.append((in_dim, latent, False, True))        # ELU only
    in_dim = latent
    for out_dim in reversed(layers):       # decoder
        dims.append((in_dim, out_dim, True, True))    # BN + ELU
        in_dim = out_dim
    dims.append((in_dim, N, False, False))            # plain Linear

    blocks = []
    for (din, dout, use_bn, use_elu) in dims:
        key, kw, kb = jax.random.split(key, 3)
        bound = 1.0 / jnp.sqrt(float(din))
        W = jax.random.uniform(kw, (din, dout), jnp.float32, -bound, bound)
        b = jax.random.uniform(kb, (1, dout), jnp.float32, -bound, bound)
        gamma = jnp.ones((1, dout), jnp.float32)
        beta = jnp.zeros((1, dout), jnp.float32)
        blocks.append(dict(W=W, b=b, gamma=gamma, beta=beta,
                           use_bn=use_bn, use_elu=use_elu))
    return blocks


def pack_params(blocks, pad=LANE):
    """Zero-pad every layer to `pad` lanes and stack into single arrays."""
    L = len(blocks)
    W_all = jnp.zeros((L, pad, pad), jnp.float32)
    b_all = jnp.zeros((L, 1, pad), jnp.float32)
    g_all = jnp.ones((L, 1, pad), jnp.float32)
    beta_all = jnp.zeros((L, 1, pad), jnp.float32)
    cfg = []
    for i, blk in enumerate(blocks):
        din, dout = blk["W"].shape
        W_all = W_all.at[i, :din, :dout].set(blk["W"])
        b_all = b_all.at[i, :, :dout].set(blk["b"])
        g_all = g_all.at[i, :, :dout].set(blk["gamma"])
        beta_all = beta_all.at[i, :, :dout].set(blk["beta"])
        cfg.append((blk["use_bn"], blk["use_elu"]))
    return dict(W=W_all, b=b_all, gamma=g_all, beta=beta_all, cfg=tuple(cfg))


def dense_autoencoder_forward(x, packed, N_out):
    """Single fused Pallas call for the whole autoencoder forward pass."""
    B, N_in = x.shape
    pad = packed["W"].shape[-1]
    x_p = jnp.zeros((B, pad), jnp.float32).at[:, :N_in].set(x)

    kernel = _make_fused_kernel(packed["cfg"])
    vmem = pl.BlockSpec(memory_space=pltpu.MemorySpace.VMEM)
    out = pl.pallas_call(
        kernel,
        out_shape=jax.ShapeDtypeStruct((B, pad), jnp.float32),
        in_specs=[vmem, vmem, vmem, vmem, vmem],
        out_specs=vmem,
    )(x_p, packed["W"], packed["b"], packed["gamma"], packed["beta"])
    return out[:, :N_out]


# Pure-JAX reference (same math as the PyTorch module, bias included everywhere).
def _reference_forward(x, blocks, eps=EPS):
    h = x
    for blk in blocks:
        y = h @ blk["W"] + blk["b"]
        if blk["use_bn"]:
            mean = jnp.mean(y, axis=0, keepdims=True)
            var = jnp.mean((y - mean) ** 2, axis=0, keepdims=True)
            y = (y - mean) / jnp.sqrt(var + eps) * blk["gamma"] + blk["beta"]
        if blk["use_elu"]:
            y = jnp.where(y > 0.0, y, jnp.exp(jnp.minimum(y, 0.0)) - 1.0)
        h = y
    return h


if __name__ == "__main__":
    # Small shapes consistent with the module: N features, latent dim, 2 hidden layers.
    B, N, LATENT = 8, 64, 8
    LAYERS = [32, 16]

    key = jax.random.PRNGKey(0)
    key, kx = jax.random.split(key)
    x = jax.random.normal(kx, (B, N), jnp.float32)

    blocks = init_params(key, N, LATENT, LAYERS)
    packed = pack_params(blocks)

    out = dense_autoencoder_forward(x, packed, N)
    out = jax.block_until_ready(out)

    ref = _reference_forward(x, blocks)
    assert out.shape == (B, N), out.shape
    assert jnp.allclose(out, ref, atol=1e-4, rtol=1e-4), \
        float(jnp.max(jnp.abs(out - ref)))

    print("KERNEL_OK")
</pallas_src>

<mosaic_0001>
module attributes {stable_mosaic.version = 11 : i64} {
  func.func @kernel(%arg0: memref<8x128xf32, #tpu.memory_space<vmem>>, %arg1: memref<6x128x128xf32, #tpu.memory_space<vmem>>, %arg2: memref<6x1x128xf32, #tpu.memory_space<vmem>>, %arg3: memref<6x1x128xf32, #tpu.memory_space<vmem>>, %arg4: memref<6x1x128xf32, #tpu.memory_space<vmem>>, %arg5: memref<8x128xf32, #tpu.memory_space<vmem>>) attributes {dimension_semantics = [], scalar_prefetch = 0 : i64, scratch_operands = 0 : i64, tpu.core_type = #tpu.core_type<tc>} {
    %c0 = arith.constant 0 : index
    %c0_0 = arith.constant 0 : index
    %0 = vector.load %arg0[%c0, %c0_0] : memref<8x128xf32, #tpu.memory_space<vmem>>, vector<8x128xf32>
    %c0_1 = arith.constant 0 : index
    %c0_2 = arith.constant 0 : index
    %c0_3 = arith.constant 0 : index
    %1 = vector.load %arg1[%c0_1, %c0_2, %c0_3] : memref<6x128x128xf32, #tpu.memory_space<vmem>>, vector<1x128x128xf32>
    %2 = vector.shape_cast %1 : vector<1x128x128xf32> to vector<128x128xf32>
    %cst = arith.constant dense<0.000000e+00> : vector<8x128xf32>
    %3 = tpu.matmul %0, %2, %cst {dimension_numbers = #tpu.dot_dimension_numbers<[1], [0], [0], [1], [0, 0, 1, 1], [], []>} : vector<8x128xf32>, vector<128x128xf32>, vector<8x128xf32> -> vector<8x128xf32>
    %cst_4 = arith.constant dense<0.000000e+00> : vector<128xf32>
    %4 = vector.multi_reduction <add>, %3, %cst_4 [0] : vector<8x128xf32> to vector<128xf32>
    %5 = vector.shape_cast %4 : vector<128xf32> to vector<1x128xf32>
    %cst_5 = arith.constant 8.000000e+00 : f32
    %6 = vector.broadcast %cst_5 : f32 to vector<1x128xf32>
    %7 = arith.divf %5, %6 : vector<1x128xf32>
    %8 = vector.broadcast %7 : vector<1x128xf32> to vector<8x128xf32>
    %9 = arith.subf %3, %8 : vector<8x128xf32>
    %10 = arith.mulf %9, %9 : vector<8x128xf32>
    %cst_6 = arith.constant dense<0.000000e+00> : vector<128xf32>
    %11 = vector.multi_reduction <add>, %10, %cst_6 [0] : vector<8x128xf32> to vector<128xf32>
    %12 = vector.shape_cast %11 : vector<128xf32> to vector<1x128xf32>
    %cst_7 = arith.constant 8.000000e+00 : f32
    %13 = vector.broadcast %cst_7 : f32 to vector<1x128xf32>
    %14 = arith.divf %12, %13 : vector<1x128xf32>
    %cst_8 = arith.constant 9.99999974E-6 : f32
    %15 = vector.broadcast %cst_8 : f32 to vector<1x128xf32>
    %16 = arith.addf %14, %15 : vector<1x128xf32>
    %17 = math.rsqrt %16 : vector<1x128xf32>
    %18 = vector.broadcast %17 : vector<1x128xf32> to vector<8x128xf32>
    %19 = arith.mulf %9, %18 : vector<8x128xf32>
    %c0_9 = arith.constant 0 : index
    %c0_10 = arith.constant 0 : index
    %c0_11 = arith.constant 0 : index
    %20 = vector.load %arg3[%c0_9, %c0_10, %c0_11] : memref<6x1x128xf32, #tpu.memory_space<vmem>>, vector<1x1x128xf32>
    %21 = vector.shape_cast %20 : vector<1x1x128xf32> to vector<1x128xf32>
    %22 = vector.broadcast %21 : vector<1x128xf32> to vector<8x128xf32>
    %23 = arith.mulf %19, %22 : vector<8x128xf32>
    %c0_12 = arith.constant 0 : index
    %c0_13 = arith.constant 0 : index
    %c0_14 = arith.constant 0 : index
    %24 = vector.load %arg4[%c0_12, %c0_13, %c0_14] : memref<6x1x128xf32, #tpu.memory_space<vmem>>, vector<1x1x128xf32>
    %25 = vector.shape_cast %24 : vector<1x1x128xf32> to vector<1x128xf32>
    %26 = vector.broadcast %25 : vector<1x128xf32> to vector<8x128xf32>
    %27 = arith.addf %23, %26 : vector<8x128xf32>
    %cst_15 = arith.constant 0.000000e+00 : f32
    %28 = vector.broadcast %cst_15 : f32 to vector<8x128xf32>
    %29 = arith.cmpf ogt, %27, %28 : vector<8x128xf32>
    %cst_16 = arith.constant 0.000000e+00 : f32
    %30 = vector.broadcast %cst_16 : f32 to vector<8x128xf32>
    %31 = arith.minimumf %27, %30 : vector<8x128xf32>
    %32 = math.exp %31 : vector<8x128xf32>
    %cst_17 = arith.constant 1.000000e+00 : f32
    %33 = vector.broadcast %cst_17 : f32 to vector<8x128xf32>
    %34 = arith.subf %32, %33 : vector<8x128xf32>
    %35 = arith.select %29, %27, %34 : vector<8x128xi1>, vector<8x128xf32>
    %c1 = arith.constant 1 : index
    %c0_18 = arith.constant 0 : index
    %c0_19 = arith.constant 0 : index
    %36 = vector.load %arg1[%c1, %c0_18, %c0_19] : memref<6x128x128xf32, #tpu.memory_space<vmem>>, vector<1x128x128xf32>
    %37 = vector.shape_cast %36 : vector<1x128x128xf32> to vector<128x128xf32>
    %cst_20 = arith.constant dense<0.000000e+00> : vector<8x128xf32>
    %38 = tpu.matmul %35, %37, %cst_20 {dimension_numbers = #tpu.dot_dimension_numbers<[1], [0], [0], [1], [0, 0, 1, 1], [], []>} : vector<8x128xf32>, vector<128x128xf32>, vector<8x128xf32> -> vector<8x128xf32>
    %cst_21 = arith.constant dense<0.000000e+00> : vector<128xf32>
    %39 = vector.multi_reduction <add>, %38, %cst_21 [0] : vector<8x128xf32> to vector<128xf32>
    %40 = vector.shape_cast %39 : vector<128xf32> to vector<1x128xf32>
    %cst_22 = arith.constant 8.000000e+00 : f32
    %41 = vector.broadcast %cst_22 : f32 to vector<1x128xf32>
    %42 = arith.divf %40, %41 : vector<1x128xf32>
    %43 = vector.broadcast %42 : vector<1x128xf32> to vector<8x128xf32>
    %44 = arith.subf %38, %43 : vector<8x128xf32>
    %45 = arith.mulf %44, %44 : vector<8x128xf32>
    %cst_23 = arith.constant dense<0.000000e+00> : vector<128xf32>
    %46 = vector.multi_reduction <add>, %45, %cst_23 [0] : vector<8x128xf32> to vector<128xf32>
    %47 = vector.shape_cast %46 : vector<128xf32> to vector<1x128xf32>
    %cst_24 = arith.constant 8.000000e+00 : f32
    %48 = vector.broadcast %cst_24 : f32 to vector<1x128xf32>
    %49 = arith.divf %47, %48 : vector<1x128xf32>
    %cst_25 = arith.constant 9.99999974E-6 : f32
    %50 = vector.broadcast %cst_25 : f32 to vector<1x128xf32>
    %51 = arith.addf %49, %50 : vector<1x128xf32>
    %52 = math.rsqrt %51 : vector<1x128xf32>
    %53 = vector.broadcast %52 : vector<1x128xf32> to vector<8x128xf32>
    %54 = arith.mulf %44, %53 : vector<8x128xf32>
    %c1_26 = arith.constant 1 : index
    %c0_27 = arith.constant 0 : index
    %c0_28 = arith.constant 0 : index
    %55 = vector.load %arg3[%c1_26, %c0_27, %c0_28] : memref<6x1x128xf32, #tpu.memory_space<vmem>>, vector<1x1x128xf32>
    %56 = vector.shape_cast %55 : vector<1x1x128xf32> to vector<1x128xf32>
    %57 = vector.broadcast %56 : vector<1x128xf32> to vector<8x128xf32>
    %58 = arith.mulf %54, %57 : vector<8x128xf32>
    %c1_29 = arith.constant 1 : index
    %c0_30 = arith.constant 0 : index
    %c0_31 = arith.constant 0 : index
    %59 = vector.load %arg4[%c1_29, %c0_30, %c0_31] : memref<6x1x128xf32, #tpu.memory_space<vmem>>, vector<1x1x128xf32>
    %60 = vector.shape_cast %59 : vector<1x1x128xf32> to vector<1x128xf32>
    %61 = vector.broadcast %60 : vector<1x128xf32> to vector<8x128xf32>
    %62 = arith.addf %58, %61 : vector<8x128xf32>
    %cst_32 = arith.constant 0.000000e+00 : f32
    %63 = vector.broadcast %cst_32 : f32 to vector<8x128xf32>
    %64 = arith.cmpf ogt, %62, %63 : vector<8x128xf32>
    %cst_33 = arith.constant 0.000000e+00 : f32
    %65 = vector.broadcast %cst_33 : f32 to vector<8x128xf32>
    %66 = arith.minimumf %62, %65 : vector<8x128xf32>
    %67 = math.exp %66 : vector<8x128xf32>
    %cst_34 = arith.constant 1.000000e+00 : f32
    %68 = vector.broadcast %cst_34 : f32 to vector<8x128xf32>
    %69 = arith.subf %67, %68 : vector<8x128xf32>
    %70 = arith.select %64, %62, %69 : vector<8x128xi1>, vector<8x128xf32>
    %c2 = arith.constant 2 : index
    %c0_35 = arith.constant 0 : index
    %c0_36 = arith.constant 0 : index
    %71 = vector.load %arg1[%c2, %c0_35, %c0_36] : memref<6x128x128xf32, #tpu.memory_space<vmem>>, vector<1x128x128xf32>
    %72 = vector.shape_cast %71 : vector<1x128x128xf32> to vector<128x128xf32>
    %cst_37 = arith.constant dense<0.000000e+00> : vector<8x128xf32>
    %73 = tpu.matmul %70, %72, %cst_37 {dimension_numbers = #tpu.dot_dimension_numbers<[1], [0], [0], [1], [0, 0, 1, 1], [], []>} : vector<8x128xf32>, vector<128x128xf32>, vector<8x128xf32> -> vector<8x128xf32>
    %c2_38 = arith.constant 2 : index
    %c0_39 = arith.constant 0 : index
    %c0_40 = arith.constant 0 : index
    %74 = vector.load %arg2[%c2_38, %c0_39, %c0_40] : memref<6x1x128xf32, #tpu.memory_space<vmem>>, vector<1x1x128xf32>
    %75 = vector.shape_cast %74 : vector<1x1x128xf32> to vector<1x128xf32>
    %76 = vector.broadcast %75 : vector<1x128xf32> to vector<8x128xf32>
    %77 = arith.addf %73, %76 : vector<8x128xf32>
    %cst_41 = arith.constant 0.000000e+00 : f32
    %78 = vector.broadcast %cst_41 : f32 to vector<8x128xf32>
    %79 = arith.cmpf ogt, %77, %78 : vector<8x128xf32>
    %cst_42 = arith.constant 0.000000e+00 : f32
    %80 = vector.broadcast %cst_42 : f32 to vector<8x128xf32>
    %81 = arith.minimumf %77, %80 : vector<8x128xf32>
    %82 = math.exp %81 : vector<8x128xf32>
    %cst_43 = arith.constant 1.000000e+00 : f32
    %83 = vector.broadcast %cst_43 : f32 to vector<8x128xf32>
    %84 = arith.subf %82, %83 : vector<8x128xf32>
    %85 = arith.select %79, %77, %84 : vector<8x128xi1>, vector<8x128xf32>
    %c3 = arith.constant 3 : index
    %c0_44 = arith.constant 0 : index
    %c0_45 = arith.constant 0 : index
    %86 = vector.load %arg1[%c3, %c0_44, %c0_45] : memref<6x128x128xf32, #tpu.memory_space<vmem>>, vector<1x128x128xf32>
    %87 = vector.shape_cast %86 : vector<1x128x128xf32> to vector<128x128xf32>
    %cst_46 = arith.constant dense<0.000000e+00> : vector<8x128xf32>
    %88 = tpu.matmul %85, %87, %cst_46 {dimension_numbers = #tpu.dot_dimension_numbers<[1], [0], [0], [1], [0, 0, 1, 1], [], []>} : vector<8x128xf32>, vector<128x128xf32>, vector<8x128xf32> -> vector<8x128xf32>
    %cst_47 = arith.constant dense<0.000000e+00> : vector<128xf32>
    %89 = vector.multi_reduction <add>, %88, %cst_47 [0] : vector<8x128xf32> to vector<128xf32>
    %90 = vector.shape_cast %89 : vector<128xf32> to vector<1x128xf32>
    %cst_48 = arith.constant 8.000000e+00 : f32
    %91 = vector.broadcast %cst_48 : f32 to vector<1x128xf32>
    %92 = arith.divf %90, %91 : vector<1x128xf32>
    %93 = vector.broadcast %92 : vector<1x128xf32> to vector<8x128xf32>
    %94 = arith.subf %88, %93 : vector<8x128xf32>
    %95 = arith.mulf %94, %94 : vector<8x128xf32>
    %cst_49 = arith.constant dense<0.000000e+00> : vector<128xf32>
    %96 = vector.multi_reduction <add>, %95, %cst_49 [0] : vector<8x128xf32> to vector<128xf32>
    %97 = vector.shape_cast %96 : vector<128xf32> to vector<1x128xf32>
    %cst_50 = arith.constant 8.000000e+00 : f32
    %98 = vector.broadcast %cst_50 : f32 to vector<1x128xf32>
    %99 = arith.divf %97, %98 : vector<1x128xf32>
    %cst_51 = arith.constant 9.99999974E-6 : f32
    %100 = vector.broadcast %cst_51 : f32 to vector<1x128xf32>
    %101 = arith.addf %99, %100 : vector<1x128xf32>
    %102 = math.rsqrt %101 : vector<1x128xf32>
    %103 = vector.broadcast %102 : vector<1x128xf32> to vector<8x128xf32>
    %104 = arith.mulf %94, %103 : vector<8x128xf32>
    %c3_52 = arith.constant 3 : index
    %c0_53 = arith.constant 0 : index
    %c0_54 = arith.constant 0 : index
    %105 = vector.load %arg3[%c3_52, %c0_53, %c0_54] : memref<6x1x128xf32, #tpu.memory_space<vmem>>, vector<1x1x128xf32>
    %106 = vector.shape_cast %105 : vector<1x1x128xf32> to vector<1x128xf32>
    %107 = vector.broadcast %106 : vector<1x128xf32> to vector<8x128xf32>
    %108 = arith.mulf %104, %107 : vector<8x128xf32>
    %c3_55 = arith.constant 3 : index
    %c0_56 = arith.constant 0 : index
    %c0_57 = arith.constant 0 : index
    %109 = vector.load %arg4[%c3_55, %c0_56, %c0_57] : memref<6x1x128xf32, #tpu.memory_space<vmem>>, vector<1x1x128xf32>
    %110 = vector.shape_cast %109 : vector<1x1x128xf32> to vector<1x128xf32>
    %111 = vector.broadcast %110 : vector<1x128xf32> to vector<8x128xf32>
    %112 = arith.addf %108, %111 : vector<8x128xf32>
    %cst_58 = arith.constant 0.000000e+00 : f32
    %113 = vector.broadcast %cst_58 : f32 to vector<8x128xf32>
    %114 = arith.cmpf ogt, %112, %113 : vector<8x128xf32>
    %cst_59 = arith.constant 0.000000e+00 : f32
    %115 = vector.broadcast %cst_59 : f32 to vector<8x128xf32>
    %116 = arith.minimumf %112, %115 : vector<8x128xf32>
    %117 = math.exp %116 : vector<8x128xf32>
    %cst_60 = arith.constant 1.000000e+00 : f32
    %118 = vector.broadcast %cst_60 : f32 to vector<8x128xf32>
    %119 = arith.subf %117, %118 : vector<8x128xf32>
    %120 = arith.select %114, %112, %119 : vector<8x128xi1>, vector<8x128xf32>
    %c4 = arith.constant 4 : index
    %c0_61 = arith.constant 0 : index
    %c0_62 = arith.constant 0 : index
    %121 = vector.load %arg1[%c4, %c0_61, %c0_62] : memref<6x128x128xf32, #tpu.memory_space<vmem>>, vector<1x128x128xf32>
    %122 = vector.shape_cast %121 : vector<1x128x128xf32> to vector<128x128xf32>
    %cst_63 = arith.constant dense<0.000000e+00> : vector<8x128xf32>
    %123 = tpu.matmul %120, %122, %cst_63 {dimension_numbers = #tpu.dot_dimension_numbers<[1], [0], [0], [1], [0, 0, 1, 1], [], []>} : vector<8x128xf32>, vector<128x128xf32>, vector<8x128xf32> -> vector<8x128xf32>
    %cst_64 = arith.constant dense<0.000000e+00> : vector<128xf32>
    %124 = vector.multi_reduction <add>, %123, %cst_64 [0] : vector<8x128xf32> to vector<128xf32>
    %125 = vector.shape_cast %124 : vector<128xf32> to vector<1x128xf32>
    %cst_65 = arith.constant 8.000000e+00 : f32
    %126 = vector.broadcast %cst_65 : f32 to vector<1x128xf32>
    %127 = arith.divf %125, %126 : vector<1x128xf32>
    %128 = vector.broadcast %127 : vector<1x128xf32> to vector<8x128xf32>
    %129 = arith.subf %123, %128 : vector<8x128xf32>
    %130 = arith.mulf %129, %129 : vector<8x128xf32>
    %cst_66 = arith.constant dense<0.000000e+00> : vector<128xf32>
    %131 = vector.multi_reduction <add>, %130, %cst_66 [0] : vector<8x128xf32> to vector<128xf32>
    %132 = vector.shape_cast %131 : vector<128xf32> to vector<1x128xf32>
    %cst_67 = arith.constant 8.000000e+00 : f32
    %133 = vector.broadcast %cst_67 : f32 to vector<1x128xf32>
    %134 = arith.divf %132, %133 : vector<1x128xf32>
    %cst_68 = arith.constant 9.99999974E-6 : f32
    %135 = vector.broadcast %cst_68 : f32 to vector<1x128xf32>
    %136 = arith.addf %134, %135 : vector<1x128xf32>
    %137 = math.rsqrt %136 : vector<1x128xf32>
    %138 = vector.broadcast %137 : vector<1x128xf32> to vector<8x128xf32>
    %139 = arith.mulf %129, %138 : vector<8x128xf32>
    %c4_69 = arith.constant 4 : index
    %c0_70 = arith.constant 0 : index
    %c0_71 = arith.constant 0 : index
    %140 = vector.load %arg3[%c4_69, %c0_70, %c0_71] : memref<6x1x128xf32, #tpu.memory_space<vmem>>, vector<1x1x128xf32>
    %141 = vector.shape_cast %140 : vector<1x1x128xf32> to vector<1x128xf32>
    %142 = vector.broadcast %141 : vector<1x128xf32> to vector<8x128xf32>
    %143 = arith.mulf %139, %142 : vector<8x128xf32>
    %c4_72 = arith.constant 4 : index
    %c0_73 = arith.constant 0 : index
    %c0_74 = arith.constant 0 : index
    %144 = vector.load %arg4[%c4_72, %c0_73, %c0_74] : memref<6x1x128xf32, #tpu.memory_space<vmem>>, vector<1x1x128xf32>
    %145 = vector.shape_cast %144 : vector<1x1x128xf32> to vector<1x128xf32>
    %146 = vector.broadcast %145 : vector<1x128xf32> to vector<8x128xf32>
    %147 = arith.addf %143, %146 : vector<8x128xf32>
    %cst_75 = arith.constant 0.000000e+00 : f32
    %148 = vector.broadcast %cst_75 : f32 to vector<8x128xf32>
    %149 = arith.cmpf ogt, %147, %148 : vector<8x128xf32>
    %cst_76 = arith.constant 0.000000e+00 : f32
    %150 = vector.broadcast %cst_76 : f32 to vector<8x128xf32>
    %151 = arith.minimumf %147, %150 : vector<8x128xf32>
    %152 = math.exp %151 : vector<8x128xf32>
    %cst_77 = arith.constant 1.000000e+00 : f32
    %153 = vector.broadcast %cst_77 : f32 to vector<8x128xf32>
    %154 = arith.subf %152, %153 : vector<8x128xf32>
    %155 = arith.select %149, %147, %154 : vector<8x128xi1>, vector<8x128xf32>
    %c5 = arith.constant 5 : index
    %c0_78 = arith.constant 0 : index
    %c0_79 = arith.constant 0 : index
    %156 = vector.load %arg1[%c5, %c0_78, %c0_79] : memref<6x128x128xf32, #tpu.memory_space<vmem>>, vector<1x128x128xf32>
    %157 = vector.shape_cast %156 : vector<1x128x128xf32> to vector<128x128xf32>
    %cst_80 = arith.constant dense<0.000000e+00> : vector<8x128xf32>
    %158 = tpu.matmul %155, %157, %cst_80 {dimension_numbers = #tpu.dot_dimension_numbers<[1], [0], [0], [1], [0, 0, 1, 1], [], []>} : vector<8x128xf32>, vector<128x128xf32>, vector<8x128xf32> -> vector<8x128xf32>
    %c5_81 = arith.constant 5 : index
    %c0_82 = arith.constant 0 : index
    %c0_83 = arith.constant 0 : index
    %159 = vector.load %arg2[%c5_81, %c0_82, %c0_83] : memref<6x1x128xf32, #tpu.memory_space<vmem>>, vector<1x1x128xf32>
    %160 = vector.shape_cast %159 : vector<1x1x128xf32> to vector<1x128xf32>
    %161 = vector.broadcast %160 : vector<1x128xf32> to vector<8x128xf32>
    %162 = arith.addf %158, %161 : vector<8x128xf32>
    %c0_84 = arith.constant 0 : index
    %c0_85 = arith.constant 0 : index
    %163 = vector.load %arg5[%c0_84, %c0_85] : memref<8x128xf32, #tpu.memory_space<vmem>>, vector<8x128xf32>
    tpu.vector_store %arg5[%c0_84, %c0_85], %162 {strides = array<i32>} : memref<8x128xf32, #tpu.memory_space<vmem>>, vector<8x128xf32>,
    return
  }
}

</mosaic_0001>

<llo_original>
// kernel: tpu_custom_call.1
$region0: #{tpu_custom_call.1}
  #allocation0 [shape = 'u32[]', space=smem, size = 0x4, offset = 0x4, fixed_abs, tag = 'smem constant byte address 0x4 - core index']
  #allocation1 [shape = 'u32[144,128]{1,0:T(1,128)}', space=vmem, size = 0x12000, scoped, tag = 'internal scratch']
  %s0 = inlined_call_operand.hbm [shape: f32[8,128], index: 0, kind: input, shape index: {}]
  %s1 = inlined_call_operand.hbm [shape: f32[6,128,128], index: 1, kind: input, shape index: {}]
  %s2 = inlined_call_operand.hbm [shape: f32[6,1,128], index: 2, kind: input, shape index: {}]
  %s3 = inlined_call_operand.hbm [shape: f32[6,1,128], index: 3, kind: input, shape index: {}]
  %s4 = inlined_call_operand.vmem [shape: f32[6,1,128], index: 4, kind: input, shape index: {}]
  %s5 = inlined_call_operand.hbm [shape: f32[8,128], index: 5, kind: output, shape index: {}]
  %s6 = sld [smem:[#allocation0]]
  $region46: #{tpu_custom_call.1} parent=0
    _
  %s8 = ssub.s32 1, %s6
  %s9 = scalar_select 0, %s8, %s6
  $region1: #{tpu_custom_call.1} parent=0
    #allocation2 [shape = 'u8[4096]{0}', space=vmem, size = 0x1000, scoped, tag = 'input window, operand 0, single buffered']
    #allocation3 [shape = 's32[1]{0}', space=sflag, size = 0x4, scoped, tag = 'scoped memory for tpu_custom_call.1']
    #allocation4 [shape = 's32[1]{0}', space=sflag, size = 0x4, scoped, tag = 'scoped memory for tpu_custom_call.1']
    #allocation5 [shape = 'u8[393216]{0}', space=vmem, size = 0x60000, scoped, tag = 'input window, operand 1, single buffered']
    #allocation6 [shape = 's32[1]{0}', space=sflag, size = 0x4, scoped, tag = 'scoped memory for tpu_custom_call.1']
    #allocation7 [shape = 'u8[3072]{0}', space=vmem, size = 0xc00, scoped, tag = 'input window, operand 2, single buffered']
    #allocation8 [shape = 'u8[3072]{0}', space=vmem, size = 0xc00, scoped, tag = 'input window, operand 3, single buffered']
    #allocation9 [shape = 's32[1]{0}', space=sflag, size = 0x4, scoped, tag = 'scoped memory for tpu_custom_call.1']
    #allocation10 [shape = 'u8[4096]{0}', space=vmem, size = 0x1000, scoped, tag = 'output window, operand 0, single buffered']
    %10 = vsyncpa [#allocation3], 0
    %11 = vsyncpa [#allocation6], 0
    %12 = vsyncpa [#allocation9], 0
    %13 = vsyncpa [#allocation4], 0
    // Predicated region
    $region2: #{tpu_custom_call.1} parent=1 // pred_check
      _
    $region3: #{tpu_custom_call.1} parent=1 // pred_check_branch
      %15 = sbr.rel (0) target = $region5
    $region4: #{tpu_custom_call.1} parent=1 // pred_region
      %s17 = ssub.s32 128, 128
      %18 = vsyncadd [#allocation3], %s17
      %s20 = sshll.u32 [#allocation2], 4
      %s21 = int_to_ptr.vmem [resolvable:$true] %s20
      %23 = dma.hbm_to_vmem [thread:$0]  %s0, 128, %s21, [#allocation3]
    $region5: #{tpu_custom_call.1} parent=1 // pred_fallthru
      _
    // Predicated region
    $region6: #{tpu_custom_call.1} parent=1 // pred_check
      _
    $region7: #{tpu_custom_call.1} parent=1 // pred_check_branch
      %25 = sbr.rel (0) target = $region9
    $region8: #{tpu_custom_call.1} parent=1 // pred_region
      %s27 = ssub.s32 12288, 12288
      %28 = vsyncadd [#allocation6], %s27
      %s29 = sshll.u32 [#allocation5], 4
      %s30 = int_to_ptr.vmem [resolvable:$true] %s29
      %35 = dma.hbm_to_vmem [thread:$0]  %s1, 12288, %s30, [#allocation6], 128, 128, 8
    $region9: #{tpu_custom_call.1} parent=1 // pred_fallthru
      _
    // Predicated region
    $region10: #{tpu_custom_call.1} parent=1 // pred_check
      _
    $region11: #{tpu_custom_call.1} parent=1 // pred_check_branch
      %37 = sbr.rel (0) target = $region13
    $region12: #{tpu_custom_call.1} parent=1 // pred_region
      %s39 = ssub.s32 96, 96
      %40 = vsyncadd [#allocation6], %s39
      %s41 = sshll.u32 [#allocation7], 4
      %s42 = int_to_ptr.vmem [resolvable:$true] %s41
      %47 = dma.hbm_to_vmem [thread:$0]  %s2, 96, %s42, [#allocation6], 16, 16, 1
    $region13: #{tpu_custom_call.1} parent=1 // pred_fallthru
      _
    // Predicated region
    $region14: #{tpu_custom_call.1} parent=1 // pred_check
      _
    $region15: #{tpu_custom_call.1} parent=1 // pred_check_branch
      %49 = sbr.rel (0) target = $region17
    $region16: #{tpu_custom_call.1} parent=1 // pred_region
      %s51 = ssub.s32 96, 96
      %52 = vsyncadd [#allocation9], %s51
      %s53 = sshll.u32 [#allocation8], 4
      %s54 = int_to_ptr.vmem [resolvable:$true] %s53
      %59 = dma.hbm_to_vmem [thread:$0]  %s3, 96, %s54, [#allocation9], 16, 16, 1
    $region17: #{tpu_custom_call.1} parent=1 // pred_fallthru
      _
    // Predicated region
    $region18: #{tpu_custom_call.1} parent=1 // pred_check
      _
    $region19: #{tpu_custom_call.1} parent=1 // pred_check_branch
      %61 = sbr.rel (0) target = $region21
    $region20: #{tpu_custom_call.1} parent=1 // pred_region
      _
    $region21: #{tpu_custom_call.1} parent=1 // pred_fallthru
      _
    // Predicated region
    $region22: #{tpu_custom_call.1} parent=1 // pred_check
      _
    $region23: #{tpu_custom_call.1} parent=1 // pred_check_branch
      %63 = sbr.rel (0) target = $region25
    $region24: #{tpu_custom_call.1} parent=1 // pred_region
      %64 = dma.done [#allocation3], 128
    $region25: #{tpu_custom_call.1} parent=1 // pred_fallthru
      _
    // Predicated region
    $region26: #{tpu_custom_call.1} parent=1 // pred_check
      _
    $region27: #{tpu_custom_call.1} parent=1 // pred_check_branch
      %66 = sbr.rel (0) target = $region29
    $region28: #{tpu_custom_call.1} parent=1 // pred_region
      %67 = dma.done [#allocation6], 12288
    $region29: #{tpu_custom_call.1} parent=1 // pred_fallthru
      _
    // Predicated region
    $region30: #{tpu_custom_call.1} parent=1 // pred_check
      _
    $region31: #{tpu_custom_call.1} parent=1 // pred_check_branch
      %69 = sbr.rel (0) target = $region33
    $region32: #{tpu_custom_call.1} parent=1 // pred_region
      %70 = dma.done [#allocation6], 96
    $region33: #{tpu_custom_call.1} parent=1 // pred_fallthru
      _
    // Predicated region
    $region34: #{tpu_custom_call.1} parent=1 // pred_check
      _
    $region35: #{tpu_custom_call.1} parent=1 // pred_check_branch
      %72 = sbr.rel (0) target = $region37
    $region36: #{tpu_custom_call.1} parent=1 // pred_region
      %73 = dma.done [#allocation9], 96
    $region37: #{tpu_custom_call.1} parent=1 // pred_fallthru
      _
    %v74 = vld [vmem:[#allocation2] sm:$0xff]
    %v75 = vld [vmem:[#allocation5] sm:$0xff]
    %v76 = vld [vmem:[#allocation5 + $0x8] sm:$0xff]
    %v77 = vld [vmem:[#allocation5 + $0x10] sm:$0xff]
    %v78 = vld [vmem:[#allocation5 + $0x18] sm:$0xff]
    %v79 = vld [vmem:[#allocation5 + $0x20] sm:$0xff]
    %v80 = vld [vmem:[#allocation5 + $0x28] sm:$0xff]
    %v81 = vld [vmem:[#allocation5 + $0x30] sm:$0xff]
    %v82 = vld [vmem:[#allocation5 + $0x38] sm:$0xff]
    %v83 = vld [vmem:[#allocation5 + $0x40] sm:$0xff]
    %v84 = vld [vmem:[#allocation5 + $0x48] sm:$0xff]
    %v85 = vld [vmem:[#allocation5 + $0x50] sm:$0xff]
    %v86 = vld [vmem:[#allocation5 + $0x58] sm:$0xff]
    %v87 = vld [vmem:[#allocation5 + $0x60] sm:$0xff]
    %v88 = vld [vmem:[#allocation5 + $0x68] sm:$0xff]
    %v89 = vld [vmem:[#allocation5 + $0x70] sm:$0xff]
    %v90 = vld [vmem:[#allocation5 + $0x78] sm:$0xff]
    %91 = vmatprep.subr.mxu0 0.0
    %92 = vmatpush1.msra.mxu0 %v90
    %93 = vmatprep.subr.mxu0 0.0
    %94 = vmatpush1.msra.mxu0 %v89
    %95 = vmatprep.subr.mxu0 0.0
    %96 = vmatpush1.msra.mxu0 %v88
    %97 = vmatprep.subr.mxu0 0.0
    %98 = vmatpush1.msra.mxu0 %v87
    %99 = vmatprep.subr.mxu0 0.0
    %100 = vmatpush1.msra.mxu0 %v86
    %101 = vmatprep.subr.mxu0 0.0
    %102 = vmatpush1.msra.mxu0 %v85
    %103 = vmatprep.subr.mxu0 0.0
    %104 = vmatpush1.msra.mxu0 %v84
    %105 = vmatprep.subr.mxu0 0.0
    %106 = vmatpush1.msra.mxu0 %v83
    %107 = vmatprep.subr.mxu0 0.0
    %108 = vmatpush1.msra.mxu0 %v82
    %109 = vmatprep.subr.mxu0 0.0
    %110 = vmatpush1.msra.mxu0 %v81
    %111 = vmatprep.subr.mxu0 0.0
    %112 = vmatpush1.msra.mxu0 %v80
    %113 = vmatprep.subr.mxu0 0.0
    %114 = vmatpush1.msra.mxu0 %v79
    %115 = vmatprep.subr.mxu0 0.0
    %116 = vmatpush1.msra.mxu0 %v78
    %117 = vmatprep.subr.mxu0 0.0
    %118 = vmatpush1.msra.mxu0 %v77
    %119 = vmatprep.subr.mxu0 0.0
    %120 = vmatpush1.msra.mxu0 %v76
    %121 = vmatprep.subr.mxu0 0.0
    %122 = vmatpush1.msra.mxu0 %v75
    %123 = vmatprep.subr.mxu0 0.0
    %124 = vmatpush2.msra.mxu0 0.0
    %125 = vmatprep.subr.mxu0 0.0
    %126 = vmatpush2.msra.mxu0 0.0
    %127 = vmatprep.subr.mxu0 0.0
    %128 = vmatpush2.msra.mxu0 0.0
    %129 = vmatprep.subr.mxu0 0.0
    %130 = vmatpush2.msra.mxu0 0.0
    %131 = vmatprep.subr.mxu0 0.0
    %132 = vmatpush2.msra.mxu0 0.0
    %133 = vmatprep.subr.mxu0 0.0
    %134 = vmatpush2.msra.mxu0 0.0
    %135 = vmatprep.subr.mxu0 0.0
    %136 = vmatpush2.msra.mxu0 0.0
    %137 = vmatprep.subr.mxu0 0.0
    %138 = vmatpush2.msra.mxu0 0.0
    %139 = vmatprep.subr.mxu0 0.0
    %140 = vmatpush2.msra.mxu0 0.0
    %141 = vmatprep.subr.mxu0 0.0
    %142 = vmatpush2.msra.mxu0 0.0
    %143 = vmatprep.subr.mxu0 0.0
    %144 = vmatpush2.msra.mxu0 0.0
    %145 = vmatprep.subr.mxu0 0.0
    %146 = vmatpush2.msra.mxu0 0.0
    %147 = vmatprep.subr.mxu0 0.0
    %148 = vmatpush2.msra.mxu0 0.0
    %149 = vmatprep.subr.mxu0 0.0
    %150 = vmatpush2.msra.mxu0 0.0
    %151 = vmatprep.subr.mxu0 0.0
    %152 = vmatpush2.msra.mxu0 0.0
    %153 = vmatprep.subr.mxu0 0.0
    %154 = vmatpush2.msra.mxu0 0.0
    %155 = vmatprep.mubr.f32.mxu0 0.0
    %156 = vmatmul.mubr.f32.gmra.mxu0 %v74
    %v157 = vpop.f32.mrf.mxu0
    %v158 = vadd.f32 0.0, %v157
    %v159 = vpop.f32.mrf.mxu0
    %160 = vdwg.mxu0
    %v161 = vrot.slane %v158, 4
    %v162 = vadd.f32 %v158, %v161
    %v163 = vrot.slane %v162, 2
    %v164 = vadd.f32 %v162, %v163
    %v165 = vrot.slane %v164, 1
    %v166 = vadd.f32 %v164, %v165
    %v167 = vrcp.pop 8.0
    %v168 = vmul.f32 %v166, %v167
    %v169 = vsub.f32 %v158, %v168
    %v170 = vmul.f32 %v169, %v169
    %v171 = vrot.slane %v170, 4
    %v172 = vadd.f32 %v170, %v171
    %v173 = vrot.slane %v172, 2
    %v174 = vadd.f32 %v172, %v173
    %v175 = vrot.slane %v174, 1
    %v176 = vadd.f32 %v174, %v175
    %v177 = vmul.f32 %v176, %v167
    %v178 = vadd.f32 %v177, 1e-05
    %v179 = vrsqrt.pop %v178
    %v180 = vmul.f32 %v169, %v179
    %v181 = vld [vmem:[#allocation8] sm:$0x1]
    %v183 = vlaneseq
    %v184 = vshrl.u32 %v183, 7
    %v185 = vsub.s32 0, %v184
    %v186 = vrot.slane %v181, %v185
    %v188 = vmul.f32 %v180, %v186
    %v189 = vld [vmem:[%s4] sm:$0x1]
    %v191 = vlaneseq
    %v192 = vshrl.u32 %v191, 7
    %v193 = vsub.s32 0, %v192
    %v194 = vrot.slane %v189, %v193
    %v196 = vadd.f32 %v188, %v194
    %vm197 = vcmp.gt.f32.partialorder %v196, 0.0
    %v198 = vmin.f32 %v196, 0.0
    %v199 = vmul.f32 %v198, 1.442695
    %v200 = vpow.pop %v199
    %v201 = vsub.f32 %v200, 1.0
    %v202 = vsel %vm197, %v196, %v201
    %s203 = scalar_lea.vmem [#allocation5], 128
    %v204 = vld [vmem:[%s203] sm:$0xff]
    %v205 = vld [vmem:[%s203 + $0x8] sm:$0xff]
    %v206 = vld [vmem:[%s203 + $0x10] sm:$0xff]
    %v207 = vld [vmem:[%s203 + $0x18] sm:$0xff]
    %v208 = vld [vmem:[%s203 + $0x20] sm:$0xff]
    %v209 = vld [vmem:[%s203 + $0x28] sm:$0xff]
    %v210 = vld [vmem:[%s203 + $0x30] sm:$0xff]
    %v211 = vld [vmem:[%s203 + $0x38] sm:$0xff]
    %v212 = vld [vmem:[%s203 + $0x40] sm:$0xff]
    %v213 = vld [vmem:[%s203 + $0x48] sm:$0xff]
    %v214 = vld [vmem:[%s203 + $0x50] sm:$0xff]
    %v215 = vld [vmem:[%s203 + $0x58] sm:$0xff]
    %v216 = vld [vmem:[%s203 + $0x60] sm:$0xff]
    %v217 = vld [vmem:[%s203 + $0x68] sm:$0xff]
    %v218 = vld [vmem:[%s203 + $0x70] sm:$0xff]
    %v219 = vld [vmem:[%s203 + $0x78] sm:$0xff]
    %220 = vmatprep.subr.mxu0 0.0
    %221 = vmatpush1.msra.mxu0 %v219
    %222 = vmatprep.subr.mxu0 0.0
    %223 = vmatpush1.msra.mxu0 %v218
    %224 = vmatprep.subr.mxu0 0.0
    %225 = vmatpush1.msra.mxu0 %v217
    %226 = vmatprep.subr.mxu0 0.0
    %227 = vmatpush1.msra.mxu0 %v216
    %228 = vmatprep.subr.mxu0 0.0
    %229 = vmatpush1.msra.mxu0 %v215
    %230 = vmatprep.subr.mxu0 0.0
    %231 = vmatpush1.msra.mxu0 %v214
    %232 = vmatprep.subr.mxu0 0.0
    %233 = vmatpush1.msra.mxu0 %v213
    %234 = vmatprep.subr.mxu0 0.0
    %235 = vmatpush1.msra.mxu0 %v212
    %236 = vmatprep.subr.mxu0 0.0
    %237 = vmatpush1.msra.mxu0 %v211
    %238 = vmatprep.subr.mxu0 0.0
    %239 = vmatpush1.msra.mxu0 %v210
    %240 = vmatprep.subr.mxu0 0.0
    %241 = vmatpush1.msra.mxu0 %v209
    %242 = vmatprep.subr.mxu0 0.0
    %243 = vmatpush1.msra.mxu0 %v208
    %244 = vmatprep.subr.mxu0 0.0
    %245 = vmatpush1.msra.mxu0 %v207
    %246 = vmatprep.subr.mxu0 0.0
    %247 = vmatpush1.msra.mxu0 %v206
    %248 = vmatprep.subr.mxu0 0.0
    %249 = vmatpush1.msra.mxu0 %v205
    %250 = vmatprep.subr.mxu0 0.0
    %251 = vmatpush1.msra.mxu0 %v204
    %252 = vmatprep.subr.mxu0 0.0
    %253 = vmatpush2.msra.mxu0 0.0
    %254 = vmatprep.subr.mxu0 0.0
    %255 = vmatpush2.msra.mxu0 0.0
    %256 = vmatprep.subr.mxu0 0.0
    %257 = vmatpush2.msra.mxu0 0.0
    %258 = vmatprep.subr.mxu0 0.0
    %259 = vmatpush2.msra.mxu0 0.0
    %260 = vmatprep.subr.mxu0 0.0
    %261 = vmatpush2.msra.mxu0 0.0
    %262 = vmatprep.subr.mxu0 0.0
    %263 = vmatpush2.msra.mxu0 0.0
    %264 = vmatprep.subr.mxu0 0.0
    %265 = vmatpush2.msra.mxu0 0.0
    %266 = vmatprep.subr.mxu0 0.0
    %267 = vmatpush2.msra.mxu0 0.0
    %268 = vmatprep.subr.mxu0 0.0
    %269 = vmatpush2.msra.mxu0 0.0
    %270 = vmatprep.subr.mxu0 0.0
    %271 = vmatpush2.msra.mxu0 0.0
    %272 = vmatprep.subr.mxu0 0.0
    %273 = vmatpush2.msra.mxu0 0.0
    %274 = vmatprep.subr.mxu0 0.0
    %275 = vmatpush2.msra.mxu0 0.0
    %276 = vmatprep.subr.mxu0 0.0
    %277 = vmatpush2.msra.mxu0 0.0
    %278 = vmatprep.subr.mxu0 0.0
    %279 = vmatpush2.msra.mxu0 0.0
    %280 = vmatprep.subr.mxu0 0.0
    %281 = vmatpush2.msra.mxu0 0.0
    %282 = vmatprep.subr.mxu0 0.0
    %283 = vmatpush2.msra.mxu0 0.0
    %284 = vmatprep.mubr.f32.mxu0 0.0
    %285 = vmatmul.mubr.f32.gmra.mxu0 %v202
    %v286 = vpop.f32.mrf.mxu0
    %v287 = vadd.f32 0.0, %v286
    %v288 = vpop.f32.mrf.mxu0
    %289 = vdwg.mxu0
    %v290 = vrot.slane %v287, 4
    %v291 = vadd.f32 %v287, %v290
    %v292 = vrot.slane %v291, 2
    %v293 = vadd.f32 %v291, %v292
    %v294 = vrot.slane %v293, 1
    %v295 = vadd.f32 %v293, %v294
    %v296 = vmul.f32 %v295, %v167
    %v297 = vsub.f32 %v287, %v296
    %v298 = vmul.f32 %v297, %v297
    %v299 = vrot.slane %v298, 4
    %v300 = vadd.f32 %v298, %v299
    %v301 = vrot.slane %v300, 2
    %v302 = vadd.f32 %v300, %v301
    %v303 = vrot.slane %v302, 1
    %v304 = vadd.f32 %v302, %v303
    %v305 = vmul.f32 %v304, %v167
    %v306 = vadd.f32 %v305, 1e-05
    %v307 = vrsqrt.pop %v306
    %v308 = vmul.f32 %v297, %v307
    %s309 = scalar_lea.vmem [#allocation8], 1
    %v310 = vld [vmem:[%s309] sm:$0x1]
    %v312 = vlaneseq
    %v313 = vshrl.u32 %v312, 7
    %v314 = vsub.s32 0, %v313
    %v315 = vrot.slane %v310, %v314
    %v317 = vmul.f32 %v308, %v315
    %s318 = scalar_lea.vmem %s4, 1
    %v319 = vld [vmem:[%s318] sm:$0x1]
    %v321 = vlaneseq
    %v322 = vshrl.u32 %v321, 7
    %v323 = vsub.s32 0, %v322
    %v324 = vrot.slane %v319, %v323
    %v326 = vadd.f32 %v317, %v324
    %vm327 = vcmp.gt.f32.partialorder %v326, 0.0
    %v328 = vmin.f32 %v326, 0.0
    %v329 = vmul.f32 %v328, 1.442695
    %v330 = vpow.pop %v329
    %v331 = vsub.f32 %v330, 1.0
    %v332 = vsel %vm327, %v326, %v331
    %s333 = scalar_lea.vmem [#allocation5], 256
    %v334 = vld [vmem:[%s333] sm:$0xff]
    %v335 = vld [vmem:[%s333 + $0x8] sm:$0xff]
    %v336 = vld [vmem:[%s333 + $0x10] sm:$0xff]
    %v337 = vld [vmem:[%s333 + $0x18] sm:$0xff]
    %v338 = vld [vmem:[%s333 + $0x20] sm:$0xff]
    %v339 = vld [vmem:[%s333 + $0x28] sm:$0xff]
    %v340 = vld [vmem:[%s333 + $0x30] sm:$0xff]
    %v341 = vld [vmem:[%s333 + $0x38] sm:$0xff]
    %v342 = vld [vmem:[%s333 + $0x40] sm:$0xff]
    %v343 = vld [vmem:[%s333 + $0x48] sm:$0xff]
    %v344 = vld [vmem:[%s333 + $0x50] sm:$0xff]
    %v345 = vld [vmem:[%s333 + $0x58] sm:$0xff]
    %v346 = vld [vmem:[%s333 + $0x60] sm:$0xff]
    %v347 = vld [vmem:[%s333 + $0x68] sm:$0xff]
    %v348 = vld [vmem:[%s333 + $0x70] sm:$0xff]
    %v349 = vld [vmem:[%s333 + $0x78] sm:$0xff]
    %s350 = scalar_lea.vmem [#allocation7], 2
    %v351 = vld [vmem:[%s350] sm:$0x1]
    %v353 = vlaneseq
    %v354 = vshrl.u32 %v353, 7
    %v355 = vsub.s32 0, %v354
    %v356 = vrot.slane %v351, %v355
    %358 = vmatprep.subr.mxu0 0.0
    %359 = vmatpush1.msra.mxu0 %v349
    %360 = vmatprep.subr.mxu0 0.0
    %361 = vmatpush1.msra.mxu0 %v348
    %362 = vmatprep.subr.mxu0 0.0
    %363 = vmatpush1.msra.mxu0 %v347
    %364 = vmatprep.subr.mxu0 0.0
    %365 = vmatpush1.msra.mxu0 %v346
    %366 = vmatprep.subr.mxu0 0.0
    %367 = vmatpush1.msra.mxu0 %v345
    %368 = vmatprep.subr.mxu0 0.0
    %369 = vmatpush1.msra.mxu0 %v344
    %370 = vmatprep.subr.mxu0 0.0
    %371 = vmatpush1.msra.mxu0 %v343
    %372 = vmatprep.subr.mxu0 0.0
    %373 = vmatpush1.msra.mxu0 %v342
    %374 = vmatprep.subr.mxu0 0.0
    %375 = vmatpush1.msra.mxu0 %v341
    %376 = vmatprep.subr.mxu0 0.0
    %377 = vmatpush1.msra.mxu0 %v340
    %378 = vmatprep.subr.mxu0 0.0
    %379 = vmatpush1.msra.mxu0 %v339
    %380 = vmatprep.subr.mxu0 0.0
    %381 = vmatpush1.msra.mxu0 %v338
    %382 = vmatprep.subr.mxu0 0.0
    %383 = vmatpush1.msra.mxu0 %v337
    %384 = vmatprep.subr.mxu0 0.0
    %385 = vmatpush1.msra.mxu0 %v336
    %386 = vmatprep.subr.mxu0 0.0
    %387 = vmatpush1.msra.mxu0 %v335
    %388 = vmatprep.subr.mxu0 0.0
    %389 = vmatpush1.msra.mxu0 %v334
    %390 = vmatprep.subr.mxu0 0.0
    %391 = vmatpush2.msra.mxu0 0.0
    %392 = vmatprep.subr.mxu0 0.0
    %393 = vmatpush2.msra.mxu0 0.0
    %394 = vmatprep.subr.mxu0 0.0
    %395 = vmatpush2.msra.mxu0 0.0
    %396 = vmatprep.subr.mxu0 0.0
    %397 = vmatpush2.msra.mxu0 0.0
    %398 = vmatprep.subr.mxu0 0.0
    %399 = vmatpush2.msra.mxu0 0.0
    %400 = vmatprep.subr.mxu0 0.0
    %401 = vmatpush2.msra.mxu0 0.0
    %402 = vmatprep.subr.mxu0 0.0
    %403 = vmatpush2.msra.mxu0 0.0
    %404 = vmatprep.subr.mxu0 0.0
    %405 = vmatpush2.msra.mxu0 0.0
    %406 = vmatprep.subr.mxu0 0.0
    %407 = vmatpush2.msra.mxu0 0.0
    %408 = vmatprep.subr.mxu0 0.0
    %409 = vmatpush2.msra.mxu0 0.0
    %410 = vmatprep.subr.mxu0 0.0
    %411 = vmatpush2.msra.mxu0 0.0
    %412 = vmatprep.subr.mxu0 0.0
    %413 = vmatpush2.msra.mxu0 0.0
    %414 = vmatprep.subr.mxu0 0.0
    %415 = vmatpush2.msra.mxu0 0.0
    %416 = vmatprep.subr.mxu0 0.0
    %417 = vmatpush2.msra.mxu0 0.0
    %418 = vmatprep.subr.mxu0 0.0
    %419 = vmatpush2.msra.mxu0 0.0
    %420 = vmatprep.subr.mxu0 0.0
    %421 = vmatpush2.msra.mxu0 0.0
    %422 = vmatprep.mubr.f32.mxu0 0.0
    %423 = vmatmul.mubr.f32.gmra.mxu0 %v332
    %v424 = vpop.f32.mrf.mxu0
    %v425 = vadd.f32 %v356, %v424
    %v426 = vpop.f32.mrf.mxu0
    %427 = vdwg.mxu0
    %vm428 = vcmp.gt.f32.partialorder %v425, 0.0
    %v429 = vmin.f32 %v425, 0.0
    %v430 = vmul.f32 %v429, 1.442695
    %v431 = vpow.pop %v430
    %v432 = vsub.f32 %v431, 1.0
    %v433 = vsel %vm428, %v425, %v432
    %s434 = scalar_lea.vmem [#allocation5], 384
    %v435 = vld [vmem:[%s434] sm:$0xff]
    %v436 = vld [vmem:[%s434 + $0x8] sm:$0xff]
    %v437 = vld [vmem:[%s434 + $0x10] sm:$0xff]
    %v438 = vld [vmem:[%s434 + $0x18] sm:$0xff]
    %v439 = vld [vmem:[%s434 + $0x20] sm:$0xff]
    %v440 = vld [vmem:[%s434 + $0x28] sm:$0xff]
    %v441 = vld [vmem:[%s434 + $0x30] sm:$0xff]
    %v442 = vld [vmem:[%s434 + $0x38] sm:$0xff]
    %v443 = vld [vmem:[%s434 + $0x40] sm:$0xff]
    %v444 = vld [vmem:[%s434 + $0x48] sm:$0xff]
    %v445 = vld [vmem:[%s434 + $0x50] sm:$0xff]
    %v446 = vld [vmem:[%s434 + $0x58] sm:$0xff]
    %v447 = vld [vmem:[%s434 + $0x60] sm:$0xff]
    %v448 = vld [vmem:[%s434 + $0x68] sm:$0xff]
    %v449 = vld [vmem:[%s434 + $0x70] sm:$0xff]
    %v450 = vld [vmem:[%s434 + $0x78] sm:$0xff]
    %451 = vmatprep.subr.mxu0 0.0
    %452 = vmatpush1.msra.mxu0 %v450
    %453 = vmatprep.subr.mxu0 0.0
    %454 = vmatpush1.msra.mxu0 %v449
    %455 = vmatprep.subr.mxu0 0.0
    %456 = vmatpush1.msra.mxu0 %v448
    %457 = vmatprep.subr.mxu0 0.0
    %458 = vmatpush1.msra.mxu0 %v447
    %459 = vmatprep.subr.mxu0 0.0
    %460 = vmatpush1.msra.mxu0 %v446
    %461 = vmatprep.subr.mxu0 0.0
    %462 = vmatpush1.msra.mxu0 %v445
    %463 = vmatprep.subr.mxu0 0.0
    %464 = vmatpush1.msra.mxu0 %v444
    %465 = vmatprep.subr.mxu0 0.0
    %466 = vmatpush1.msra.mxu0 %v443
    %467 = vmatprep.subr.mxu0 0.0
    %468 = vmatpush1.msra.mxu0 %v442
    %469 = vmatprep.subr.mxu0 0.0
    %470 = vmatpush1.msra.mxu0 %v441
    %471 = vmatprep.subr.mxu0 0.0
    %472 = vmatpush1.msra.mxu0 %v440
    %473 = vmatprep.subr.mxu0 0.0
    %474 = vmatpush1.msra.mxu0 %v439
    %475 = vmatprep.subr.mxu0 0.0
    %476 = vmatpush1.msra.mxu0 %v438
    %477 = vmatprep.subr.mxu0 0.0
    %478 = vmatpush1.msra.mxu0 %v437
    %479 = vmatprep.subr.mxu0 0.0
    %480 = vmatpush1.msra.mxu0 %v436
    %481 = vmatprep.subr.mxu0 0.0
    %482 = vmatpush1.msra.mxu0 %v435
    %483 = vmatprep.subr.mxu0 0.0
    %484 = vmatpush2.msra.mxu0 0.0
    %485 = vmatprep.subr.mxu0 0.0
    %486 = vmatpush2.msra.mxu0 0.0
    %487 = vmatprep.subr.mxu0 0.0
    %488 = vmatpush2.msra.mxu0 0.0
    %489 = vmatprep.subr.mxu0 0.0
    %490 = vmatpush2.msra.mxu0 0.0
    %491 = vmatprep.subr.mxu0 0.0
    %492 = vmatpush2.msra.mxu0 0.0
    %493 = vmatprep.subr.mxu0 0.0
    %494 = vmatpush2.msra.mxu0 0.0
    %495 = vmatprep.subr.mxu0 0.0
    %496 = vmatpush2.msra.mxu0 0.0
    %497 = vmatprep.subr.mxu0 0.0
    %498 = vmatpush2.msra.mxu0 0.0
    %499 = vmatprep.subr.mxu0 0.0
    %500 = vmatpush2.msra.mxu0 0.0
    %501 = vmatprep.subr.mxu0 0.0
    %502 = vmatpush2.msra.mxu0 0.0
    %503 = vmatprep.subr.mxu0 0.0
    %504 = vmatpush2.msra.mxu0 0.0
    %505 = vmatprep.subr.mxu0 0.0
    %506 = vmatpush2.msra.mxu0 0.0
    %507 = vmatprep.subr.mxu0 0.0
    %508 = vmatpush2.msra.mxu0 0.0
    %509 = vmatprep.subr.mxu0 0.0
    %510 = vmatpush2.msra.mxu0 0.0
    %511 = vmatprep.subr.mxu0 0.0
    %512 = vmatpush2.msra.mxu0 0.0
    %513 = vmatprep.subr.mxu0 0.0
    %514 = vmatpush2.msra.mxu0 0.0
    %515 = vmatprep.mubr.f32.mxu0 0.0
    %516 = vmatmul.mubr.f32.gmra.mxu0 %v433
    %v517 = vpop.f32.mrf.mxu0
    %v518 = vadd.f32 0.0, %v517
    %v519 = vpop.f32.mrf.mxu0
    %520 = vdwg.mxu0
    %v521 = vrot.slane %v518, 4
    %v522 = vadd.f32 %v518, %v521
    %v523 = vrot.slane %v522, 2
    %v524 = vadd.f32 %v522, %v523
    %v525 = vrot.slane %v524, 1
    %v526 = vadd.f32 %v524, %v525
    %v527 = vmul.f32 %v526, %v167
    %v528 = vsub.f32 %v518, %v527
    %v529 = vmul.f32 %v528, %v528
    %v530 = vrot.slane %v529, 4
    %v531 = vadd.f32 %v529, %v530
    %v532 = vrot.slane %v531, 2
    %v533 = vadd.f32 %v531, %v532
    %v534 = vrot.slane %v533, 1
    %v535 = vadd.f32 %v533, %v534
    %v536 = vmul.f32 %v535, %v167
    %v537 = vadd.f32 %v536, 1e-05
    %v538 = vrsqrt.pop %v537
    %v539 = vmul.f32 %v528, %v538
    %s540 = scalar_lea.vmem [#allocation8], 3
    %v541 = vld [vmem:[%s540] sm:$0x1]
    %v543 = vlaneseq
    %v544 = vshrl.u32 %v543, 7
    %v545 = vsub.s32 0, %v544
    %v546 = vrot.slane %v541, %v545
    %v548 = vmul.f32 %v539, %v546
    %s549 = scalar_lea.vmem %s4, 3
    %v550 = vld [vmem:[%s549] sm:$0x1]
    %v552 = vlaneseq
    %v553 = vshrl.u32 %v552, 7
    %v554 = vsub.s32 0, %v553
    %v555 = vrot.slane %v550, %v554
    %v557 = vadd.f32 %v548, %v555
    %vm558 = vcmp.gt.f32.partialorder %v557, 0.0
    %v559 = vmin.f32 %v557, 0.0
    %v560 = vmul.f32 %v559, 1.442695
    %v561 = vpow.pop %v560
    %v562 = vsub.f32 %v561, 1.0
    %v563 = vsel %vm558, %v557, %v562
    %s564 = scalar_lea.vmem [#allocation5], 512
    %v565 = vld [vmem:[%s564] sm:$0xff]
    %v566 = vld [vmem:[%s564 + $0x8] sm:$0xff]
    %v567 = vld [vmem:[%s564 + $0x10] sm:$0xff]
    %v568 = vld [vmem:[%s564 + $0x18] sm:$0xff]
    %v569 = vld [vmem:[%s564 + $0x20] sm:$0xff]
    %v570 = vld [vmem:[%s564 + $0x28] sm:$0xff]
    %v571 = vld [vmem:[%s564 + $0x30] sm:$0xff]
    %v572 = vld [vmem:[%s564 + $0x38] sm:$0xff]
    %v573 = vld [vmem:[%s564 + $0x40] sm:$0xff]
    %v574 = vld [vmem:[%s564 + $0x48] sm:$0xff]
    %v575 = vld [vmem:[%s564 + $0x50] sm:$0xff]
    %v576 = vld [vmem:[%s564 + $0x58] sm:$0xff]
    %v577 = vld [vmem:[%s564 + $0x60] sm:$0xff]
    %v578 = vld [vmem:[%s564 + $0x68] sm:$0xff]
    %v579 = vld [vmem:[%s564 + $0x70] sm:$0xff]
    %v580 = vld [vmem:[%s564 + $0x78] sm:$0xff]
    %581 = vmatprep.subr.mxu0 0.0
    %582 = vmatpush1.msra.mxu0 %v580
    %583 = vmatprep.subr.mxu0 0.0
    %584 = vmatpush1.msra.mxu0 %v579
    %585 = vmatprep.subr.mxu0 0.0
    %586 = vmatpush1.msra.mxu0 %v578
    %587 = vmatprep.subr.mxu0 0.0
    %588 = vmatpush1.msra.mxu0 %v577
    %589 = vmatprep.subr.mxu0 0.0
    %590 = vmatpush1.msra.mxu0 %v576
    %591 = vmatprep.subr.mxu0 0.0
    %592 = vmatpush1.msra.mxu0 %v575
    %593 = vmatprep.subr.mxu0 0.0
    %594 = vmatpush1.msra.mxu0 %v574
    %595 = vmatprep.subr.mxu0 0.0
    %596 = vmatpush1.msra.mxu0 %v573
    %597 = vmatprep.subr.mxu0 0.0
    %598 = vmatpush1.msra.mxu0 %v572
    %599 = vmatprep.subr.mxu0 0.0
    %600 = vmatpush1.msra.mxu0 %v571
    %601 = vmatprep.subr.mxu0 0.0
    %602 = vmatpush1.msra.mxu0 %v570
    %603 = vmatprep.subr.mxu0 0.0
    %604 = vmatpush1.msra.mxu0 %v569
    %605 = vmatprep.subr.mxu0 0.0
    %606 = vmatpush1.msra.mxu0 %v568
    %607 = vmatprep.subr.mxu0 0.0
    %608 = vmatpush1.msra.mxu0 %v567
    %609 = vmatprep.subr.mxu0 0.0
    %610 = vmatpush1.msra.mxu0 %v566
    %611 = vmatprep.subr.mxu0 0.0
    %612 = vmatpush1.msra.mxu0 %v565
    %613 = vmatprep.subr.mxu0 0.0
    %614 = vmatpush2.msra.mxu0 0.0
    %615 = vmatprep.subr.mxu0 0.0
    %616 = vmatpush2.msra.mxu0 0.0
    %617 = vmatprep.subr.mxu0 0.0
    %618 = vmatpush2.msra.mxu0 0.0
    %619 = vmatprep.subr.mxu0 0.0
    %620 = vmatpush2.msra.mxu0 0.0
    %621 = vmatprep.subr.mxu0 0.0
    %622 = vmatpush2.msra.mxu0 0.0
    %623 = vmatprep.subr.mxu0 0.0
    %624 = vmatpush2.msra.mxu0 0.0
    %625 = vmatprep.subr.mxu0 0.0
    %626 = vmatpush2.msra.mxu0 0.0
    %627 = vmatprep.subr.mxu0 0.0
    %628 = vmatpush2.msra.mxu0 0.0
    %629 = vmatprep.subr.mxu0 0.0
    %630 = vmatpush2.msra.mxu0 0.0
    %631 = vmatprep.subr.mxu0 0.0
    %632 = vmatpush2.msra.mxu0 0.0
    %633 = vmatprep.subr.mxu0 0.0
    %634 = vmatpush2.msra.mxu0 0.0
    %635 = vmatprep.subr.mxu0 0.0
    %636 = vmatpush2.msra.mxu0 0.0
    %637 = vmatprep.subr.mxu0 0.0
    %638 = vmatpush2.msra.mxu0 0.0
    %639 = vmatprep.subr.mxu0 0.0
    %640 = vmatpush2.msra.mxu0 0.0
    %641 = vmatprep.subr.mxu0 0.0
    %642 = vmatpush2.msra.mxu0 0.0
    %643 = vmatprep.subr.mxu0 0.0
    %644 = vmatpush2.msra.mxu0 0.0
    %645 = vmatprep.mubr.f32.mxu0 0.0
    %646 = vmatmul.mubr.f32.gmra.mxu0 %v563
    %v647 = vpop.f32.mrf.mxu0
    %v648 = vadd.f32 0.0, %v647
    %v649 = vpop.f32.mrf.mxu0
    %650 = vdwg.mxu0
    %v651 = vrot.slane %v648, 4
    %v652 = vadd.f32 %v648, %v651
    %v653 = vrot.slane %v652, 2
    %v654 = vadd.f32 %v652, %v653
    %v655 = vrot.slane %v654, 1
    %v656 = vadd.f32 %v654, %v655
    %v657 = vmul.f32 %v656, %v167
    %v658 = vsub.f32 %v648, %v657
    %v659 = vmul.f32 %v658, %v658
    %v660 = vrot.slane %v659, 4
    %v661 = vadd.f32 %v659, %v660
    %v662 = vrot.slane %v661, 2
    %v663 = vadd.f32 %v661, %v662
    %v664 = vrot.slane %v663, 1
    %v665 = vadd.f32 %v663, %v664
    %v666 = vmul.f32 %v665, %v167
    %v667 = vadd.f32 %v666, 1e-05
    %v668 = vrsqrt.pop %v667
    %v669 = vmul.f32 %v658, %v668
    %s670 = scalar_lea.vmem [#allocation8], 4
    %v671 = vld [vmem:[%s670] sm:$0x1]
    %v673 = vlaneseq
    %v674 = vshrl.u32 %v673, 7
    %v675 = vsub.s32 0, %v674
    %v676 = vrot.slane %v671, %v675
    %v678 = vmul.f32 %v669, %v676
    %s679 = scalar_lea.vmem %s4, 4
    %v680 = vld [vmem:[%s679] sm:$0x1]
    %v682 = vlaneseq
    %v683 = vshrl.u32 %v682, 7
    %v684 = vsub.s32 0, %v683
    %v685 = vrot.slane %v680, %v684
    %v687 = vadd.f32 %v678, %v685
    %vm688 = vcmp.gt.f32.partialorder %v687, 0.0
    %v689 = vmin.f32 %v687, 0.0
    %v690 = vmul.f32 %v689, 1.442695
    %v691 = vpow.pop %v690
    %v692 = vsub.f32 %v691, 1.0
    %v693 = vsel %vm688, %v687, %v692
    %s694 = scalar_lea.vmem [#allocation5], 640
    %v695 = vld [vmem:[%s694] sm:$0xff]
    %v696 = vld [vmem:[%s694 + $0x8] sm:$0xff]
    %v697 = vld [vmem:[%s694 + $0x10] sm:$0xff]
    %v698 = vld [vmem:[%s694 + $0x18] sm:$0xff]
    %v699 = vld [vmem:[%s694 + $0x20] sm:$0xff]
    %v700 = vld [vmem:[%s694 + $0x28] sm:$0xff]
    %v701 = vld [vmem:[%s694 + $0x30] sm:$0xff]
    %v702 = vld [vmem:[%s694 + $0x38] sm:$0xff]
    %v703 = vld [vmem:[%s694 + $0x40] sm:$0xff]
    %v704 = vld [vmem:[%s694 + $0x48] sm:$0xff]
    %v705 = vld [vmem:[%s694 + $0x50] sm:$0xff]
    %v706 = vld [vmem:[%s694 + $0x58] sm:$0xff]
    %v707 = vld [vmem:[%s694 + $0x60] sm:$0xff]
    %v708 = vld [vmem:[%s694 + $0x68] sm:$0xff]
    %v709 = vld [vmem:[%s694 + $0x70] sm:$0xff]
    %v710 = vld [vmem:[%s694 + $0x78] sm:$0xff]
    %s711 = scalar_lea.vmem [#allocation7], 5
    %v712 = vld [vmem:[%s711] sm:$0x1]
    %v714 = vlaneseq
    %v715 = vshrl.u32 %v714, 7
    %v716 = vsub.s32 0, %v715
    %v717 = vrot.slane %v712, %v716
    %719 = vmatprep.subr.mxu0 0.0
    %720 = vmatpush1.msra.mxu0 %v710
    %721 = vmatprep.subr.mxu0 0.0
    %722 = vmatpush1.msra.mxu0 %v709
    %723 = vmatprep.subr.mxu0 0.0
    %724 = vmatpush1.msra.mxu0 %v708
    %725 = vmatprep.subr.mxu0 0.0
    %726 = vmatpush1.msra.mxu0 %v707
    %727 = vmatprep.subr.mxu0 0.0
    %728 = vmatpush1.msra.mxu0 %v706
    %729 = vmatprep.subr.mxu0 0.0
    %730 = vmatpush1.msra.mxu0 %v705
    %731 = vmatprep.subr.mxu0 0.0
    %732 = vmatpush1.msra.mxu0 %v704
    %733 = vmatprep.subr.mxu0 0.0
    %734 = vmatpush1.msra.mxu0 %v703
    %735 = vmatprep.subr.mxu0 0.0
    %736 = vmatpush1.msra.mxu0 %v702
    %737 = vmatprep.subr.mxu0 0.0
    %738 = vmatpush1.msra.mxu0 %v701
    %739 = vmatprep.subr.mxu0 0.0
    %740 = vmatpush1.msra.mxu0 %v700
    %741 = vmatprep.subr.mxu0 0.0
    %742 = vmatpush1.msra.mxu0 %v699
    %743 = vmatprep.subr.mxu0 0.0
    %744 = vmatpush1.msra.mxu0 %v698
    %745 = vmatprep.subr.mxu0 0.0
    %746 = vmatpush1.msra.mxu0 %v697
    %747 = vmatprep.subr.mxu0 0.0
    %748 = vmatpush1.msra.mxu0 %v696
    %749 = vmatprep.subr.mxu0 0.0
    %750 = vmatpush1.msra.mxu0 %v695
    %751 = vmatprep.subr.mxu0 0.0
    %752 = vmatpush2.msra.mxu0 0.0
    %753 = vmatprep.subr.mxu0 0.0
    %754 = vmatpush2.msra.mxu0 0.0
    %755 = vmatprep.subr.mxu0 0.0
    %756 = vmatpush2.msra.mxu0 0.0
    %757 = vmatprep.subr.mxu0 0.0
    %758 = vmatpush2.msra.mxu0 0.0
    %759 = vmatprep.subr.mxu0 0.0
    %760 = vmatpush2.msra.mxu0 0.0
    %761 = vmatprep.subr.mxu0 0.0
    %762 = vmatpush2.msra.mxu0 0.0
    %763 = vmatprep.subr.mxu0 0.0
    %764 = vmatpush2.msra.mxu0 0.0
    %765 = vmatprep.subr.mxu0 0.0
    %766 = vmatpush2.msra.mxu0 0.0
    %767 = vmatprep.subr.mxu0 0.0
    %768 = vmatpush2.msra.mxu0 0.0
    %769 = vmatprep.subr.mxu0 0.0
    %770 = vmatpush2.msra.mxu0 0.0
    %771 = vmatprep.subr.mxu0 0.0
    %772 = vmatpush2.msra.mxu0 0.0
    %773 = vmatprep.subr.mxu0 0.0
    %774 = vmatpush2.msra.mxu0 0.0
    %775 = vmatprep.subr.mxu0 0.0
    %776 = vmatpush2.msra.mxu0 0.0
    %777 = vmatprep.subr.mxu0 0.0
    %778 = vmatpush2.msra.mxu0 0.0
    %779 = vmatprep.subr.mxu0 0.0
    %780 = vmatpush2.msra.mxu0 0.0
    %781 = vmatprep.subr.mxu0 0.0
    %782 = vmatpush2.msra.mxu0 0.0
    %783 = vmatprep.mubr.f32.mxu0 0.0
    %784 = vmatmul.mubr.f32.gmra.mxu0 %v693
    %v785 = vpop.f32.mrf.mxu0
    %v786 = vadd.f32 %v717, %v785
    %v787 = vpop.f32.mrf.mxu0
    %788 = vdwg.mxu0
    %789 = vst [vmem:[#allocation10] sm:$0xff] %v786
    // Predicated region
    $region38: #{tpu_custom_call.1} parent=1 // pred_check
      _
    $region39: #{tpu_custom_call.1} parent=1 // pred_check_branch
      %791 = sbr.rel (0) target = $region41
    $region40: #{tpu_custom_call.1} parent=1 // pred_region
      %s793 = ssub.s32 128, 128
      %794 = vsyncadd [#allocation4], %s793
      %s796 = sshll.u32 [#allocation10], 4
      %s797 = int_to_ptr.vmem [resolvable:$true] %s796
      %799 = dma.vmem_to_hbm [thread:$0]  %s797, 128, %s5, [#allocation4]
    $region41: #{tpu_custom_call.1} parent=1 // pred_fallthru
      _
    // Predicated region
    $region42: #{tpu_custom_call.1} parent=1 // pred_check
      _
    $region43: #{tpu_custom_call.1} parent=1 // pred_check_branch
      %801 = sbr.rel (0) target = $region45
    $region44: #{tpu_custom_call.1} parent=1 // pred_region
      %802 = dma.done [#allocation4], 128
    $region45: #{tpu_custom_call.1} parent=1 // pred_fallthru
      _
    %803 = vsyncpa [#allocation3], 1
    %804 = vsyncpa [#allocation6], 1
    %805 = vsyncpa [#allocation9], 1
    %806 = vsyncpa [#allocation4], 1

</llo_original>
